<compile_context>
chip_gen: v5e
topology: v5e:2x2
jax: 0.10.0
libtpu: 0.0.40
codegen_flags: <defaults>
</compile_context>

<pallas_src>
import jax
import jax.numpy as jnp
from jax.experimental import pallas as pl
from jax.experimental.pallas import tpu as pltpu

LANE = 128
SUBLANE = 8
NEG_INF = jnp.float32(-1e30)


def _round_up(x, m):
    return ((x + m - 1) // m) * m


def _pick_batch_tile(batch, tb):
    """Batch-tile size: multiple of 16, and >= 2 grid steps when batch > 16."""
    if tb is None:
        tb = 256  # 256 hits ~the HBM roofline while keeping activations small
    tb = _round_up(max(int(tb), SUBLANE), SUBLANE)
    if batch <= 16:
        return _round_up(batch, SUBLANE)
    # At least two grid steps so both v7x TensorCores get work; keep the tile
    # a multiple of 16 so bf16-packed sublanes stay unmasked.
    two_step = _round_up(pl.cdiv(batch, 2), 16)
    return max(16, min(_round_up(tb, 16), two_step))


def _resident_spec(arr):
    """Full-array block with a constant index_map -> DMA'd once, VMEM-resident.

    Note: when fc dims grow to the multi-MiB range, switch these to single
    buffering (pipeline_mode=pl.Buffered(1)) so the default double-buffering
    does not double the resident-weight footprint on v7x's 64 MiB VMEM.
    """
    nd = arr.ndim
    return pl.BlockSpec(arr.shape, lambda i, _nd=nd: (0,) * _nd)


def actor_mlp_kernel(x_ref, w1_ref, b1_ref, w2_ref, b2_ref, w3_ref, b3_ref,
                     probs_ref):
    """Fused 3-layer MLP + softmax for one batch tile.

    Weights arrive pre-cast to bf16 (MXU-native); biases stay f32. All matmuls
    accumulate in f32 on the MXU. Output block is lane-padded to 128; padded
    logits carry a -1e30 bias so their softmax probability is exactly 0.
    """
    # Read biases once; rely on implicit broadcast over the batch tile.
    b1 = b1_ref[...]
    b2 = b2_ref[...]
    b3 = b3_ref[...]

    x = x_ref[...].astype(jnp.bfloat16)

    # fc1 + ReLU
    h1 = jnp.dot(x, w1_ref[...], preferred_element_type=jnp.float32) + b1
    h1 = jnp.maximum(h1, 0.0).astype(jnp.bfloat16)

    # fc2 + ReLU
    h2 = jnp.dot(h1, w2_ref[...], preferred_element_type=jnp.float32) + b2
    h2 = jnp.maximum(h2, 0.0).astype(jnp.bfloat16)

    # output projection (padded columns carry a -1e30 bias -> exp() == 0)
    logits = jnp.dot(h2, w3_ref[...], preferred_element_type=jnp.float32) + b3

    # numerically-stable softmax over the last (lane) dim; exact reciprocal so
    # each row of the Categorical sums to 1 within f32 rounding (PPO ratios
    # are sensitive to a systematic denominator error).
    m = jnp.max(logits, axis=-1, keepdims=True)
    e = jnp.exp(logits - m)
    denom = jnp.sum(e, axis=-1, keepdims=True)
    probs_ref[...] = (e / denom).astype(probs_ref.dtype)


def actor_forward(state, params, *, tb=None):
    """Batch-tiled pallas_call wrapper.

    state:  (batch, input_dims) f32
    params: (w1, b1, w2, b2, w3, b3) f32; weights stored (in, out), biases (1, out).

    Returns the kernel's lane-padded output block of shape
    (round_up(batch, tile), round_up(n_actions, 128)) f32.  Rows [:batch] and
    lanes [:n_actions] hold the softmax probabilities; padded lanes are
    exactly 0 and padded rows are don't-care, so the Categorical consumer can
    slice / sample directly (no wrapper-side copy of the padded array).
    """
    w1, b1, w2, b2, w3, b3 = params
    batch, input_dims = state.shape
    fc1_dims = w1.shape[1]
    fc2_dims = w2.shape[1]
    n_actions = w3.shape[1]

    # --- lane-dense output: pad the final projection to a multiple of 128 ---
    n_pad = _round_up(n_actions, LANE)
    if n_pad != n_actions:
        w3p = jnp.zeros((w3.shape[0], n_pad), w3.dtype).at[:, :n_actions].set(w3)
        b3p = jnp.full((1, n_pad), NEG_INF, b3.dtype).at[:, :n_actions].set(b3)
    else:
        w3p, b3p = w3, b3

    # --- bf16 weights for the MXU (cast once here, not per grid step) ---
    # (input_dims is deliberately NOT padded in HBM: the fc1 matmul is nowhere
    # near the bottleneck and padding would inflate per-row input reads.)
    w1b = w1.astype(jnp.bfloat16)
    w2b = w2.astype(jnp.bfloat16)
    w3b = w3p.astype(jnp.bfloat16)

    # --- batch tiling: weights resident, state/probs pipelined per tile ---
    tb = _pick_batch_tile(batch, tb)
    pb = _round_up(batch, tb)
    if pb != batch:
        state = jnp.zeros((pb, input_dims), state.dtype).at[:batch].set(state)
    nb = pb // tb

    # --- scheduler hint for surrounding PPO ops ---
    weight_bytes = (w1b.size + w2b.size + w3b.size) * 2   # bf16
    bias_bytes = (b1.size + b2.size + b3p.size) * 4        # f32
    cost = pl.CostEstimate(
        flops=2 * pb * (input_dims * fc1_dims
                        + fc1_dims * fc2_dims
                        + fc2_dims * n_pad),
        transcendentals=pb * n_pad,
        bytes_accessed=(pb * input_dims * 4 + pb * n_pad * 4
                        + weight_bytes + bias_bytes),
    )

    # --- scoped-VMEM guard (only when the resident footprint gets large) ---
    # Default pipeliner double-buffers everything (incl. the once-fetched
    # weights), plus the f32/bf16 activation temporaries per tile.
    vmem_needed = (2 * (weight_bytes + bias_bytes)
                   + 2 * (tb * input_dims * 4 + tb * n_pad * 4)
                   + 2 * tb * (fc1_dims + fc2_dims + n_pad) * 4)
    vmem_limit = None
    if vmem_needed > 24 * (1 << 20):
        vmem_limit = min(vmem_needed + (8 << 20), 120 * (1 << 20))

    return pl.pallas_call(
        actor_mlp_kernel,
        out_shape=jax.ShapeDtypeStruct((pb, n_pad), jnp.float32),
        grid_spec=pltpu.PrefetchScalarGridSpec(
            num_scalar_prefetch=0,
            grid=(nb,),
            in_specs=[
                pl.BlockSpec((tb, input_dims), lambda i: (i, 0)),
                _resident_spec(w1b), _resident_spec(b1),
                _resident_spec(w2b), _resident_spec(b2),
                _resident_spec(w3b), _resident_spec(b3p),
            ],
            out_specs=pl.BlockSpec((tb, n_pad), lambda i: (i, 0)),
        ),
        compiler_params=pltpu.CompilerParams(
            dimension_semantics=("parallel",),
            vmem_limit_bytes=vmem_limit),
        cost_estimate=cost,
    )(state, w1b, b1, w2b, b2, w3b, b3p)


def init_params(key, input_dims, fc1_dims, fc2_dims, n_actions):
    """Deterministic init mimicking nn.Linear's uniform(-1/sqrt(fan_in), +)."""
    ks = jax.random.split(key, 6)

    def lin(kw, kb, fan_in, fan_out):
        bound = 1.0 / jnp.sqrt(jnp.float32(fan_in))
        w = jax.random.uniform(kw, (fan_in, fan_out), jnp.float32, -bound, bound)
        b = jax.random.uniform(kb, (1, fan_out), jnp.float32, -bound, bound)
        return w, b

    w1, b1 = lin(ks[0], ks[1], input_dims, fc1_dims)
    w2, b2 = lin(ks[2], ks[3], fc1_dims, fc2_dims)
    w3, b3 = lin(ks[4], ks[5], fc2_dims, n_actions)
    return (w1, b1, w2, b2, w3, b3)


def actor_forward_ref(state, params):
    """Pure-JAX f32 reference for correctness checking."""
    w1, b1, w2, b2, w3, b3 = params
    h1 = jnp.maximum(state @ w1 + b1, 0.0)
    h2 = jnp.maximum(h1 @ w2 + b2, 0.0)
    logits = h2 @ w3 + b3
    return jax.nn.softmax(logits, axis=-1)


if __name__ == "__main__":
    # Small shapes consistent with the module: state vector of length 16,
    # fc1/fc2 hidden 128 (stand-in for the default 256), 8 discrete actions.
    # batch=24 exercises the 2-step grid (tb=16) and row padding (pb=32).
    batch = 24
    input_dims = 16
    fc1_dims = 128
    fc2_dims = 128
    n_actions = 8

    key = jax.random.PRNGKey(0)
    k_state, k_params = jax.random.split(key)

    state = jax.random.normal(k_state, (batch, input_dims), jnp.float32)
    params = init_params(k_params, input_dims, fc1_dims, fc2_dims, n_actions)

    padded = actor_forward(state, params)
    padded = jax.block_until_ready(padded)

    # Consumer-side view: Categorical over the first n_actions lanes.
    probs = padded[:batch, :n_actions]

    ref = actor_forward_ref(state, params)
    assert probs.shape == (batch, n_actions)
    assert padded.shape[1] % LANE == 0 and padded.shape[0] % SUBLANE == 0
    # Padded lanes must be (numerically) zero so sampling over them never hits.
    assert float(jnp.max(jnp.abs(padded[:batch, n_actions:]))) < 1e-20
    # bf16 MXU inputs -> loosened element tolerance vs the f32 reference.
    assert jnp.allclose(probs, ref, atol=3e-2, rtol=5e-2), "mismatch vs reference"
    # Exact reciprocal: rows of the Categorical sum to 1 at f32 accuracy.
    assert jnp.allclose(jnp.sum(probs, axis=-1), 1.0, atol=1e-5)

    print("KERNEL_OK")
</pallas_src>

<mosaic_0001>
module attributes {stable_mosaic.version = 11 : i64} {
  func.func @actor_mlp_kernel(%arg0: i32, %arg1: memref<16x16xf32, #tpu.memory_space<vmem>>, %arg2: memref<16x128xbf16, #tpu.memory_space<vmem>>, %arg3: memref<1x128xf32, #tpu.memory_space<vmem>>, %arg4: memref<128x128xbf16, #tpu.memory_space<vmem>>, %arg5: memref<1x128xf32, #tpu.memory_space<vmem>>, %arg6: memref<128x128xbf16, #tpu.memory_space<vmem>>, %arg7: memref<1x128xf32, #tpu.memory_space<vmem>>, %arg8: memref<16x128xf32, #tpu.memory_space<vmem>>) attributes {dimension_semantics = [#tpu.dimension_semantics<parallel>], iteration_bounds = array<i64: 2>, scalar_prefetch = 0 : i64, scratch_operands = 0 : i64, tpu.core_type = #tpu.core_type<tc>, window_params = [{transform_indices = @transform_0, window_bounds = array<i64: 16, 16>}, {pipeline_mode = #tpu.pipeline_mode<synchronous>, transform_indices = @transform_1, window_bounds = array<i64: 16, 128>}, {pipeline_mode = #tpu.pipeline_mode<synchronous>, transform_indices = @transform_2, window_bounds = array<i64: 1, 128>}, {pipeline_mode = #tpu.pipeline_mode<synchronous>, transform_indices = @transform_3, window_bounds = array<i64: 128, 128>}, {pipeline_mode = #tpu.pipeline_mode<synchronous>, transform_indices = @transform_4, window_bounds = array<i64: 1, 128>}, {pipeline_mode = #tpu.pipeline_mode<synchronous>, transform_indices = @transform_5, window_bounds = array<i64: 128, 128>}, {pipeline_mode = #tpu.pipeline_mode<synchronous>, transform_indices = @transform_6, window_bounds = array<i64: 1, 128>}, {transform_indices = @transform_7, window_bounds = array<i64: 16, 128>}]} {
    %c0 = arith.constant 0 : index
    %c0_0 = arith.constant 0 : index
    %0 = vector.load %arg3[%c0, %c0_0] : memref<1x128xf32, #tpu.memory_space<vmem>>, vector<1x128xf32>
    %c0_1 = arith.constant 0 : index
    %c0_2 = arith.constant 0 : index
    %1 = vector.load %arg5[%c0_1, %c0_2] : memref<1x128xf32, #tpu.memory_space<vmem>>, vector<1x128xf32>
    %c0_3 = arith.constant 0 : index
    %c0_4 = arith.constant 0 : index
    %2 = vector.load %arg7[%c0_3, %c0_4] : memref<1x128xf32, #tpu.memory_space<vmem>>, vector<1x128xf32>
    %c0_5 = arith.constant 0 : index
    %c0_6 = arith.constant 0 : index
    %3 = vector.load %arg1[%c0_5, %c0_6] : memref<16x16xf32, #tpu.memory_space<vmem>>, vector<16x16xf32>
    %4 = arith.truncf %3 : vector<16x16xf32> to vector<16x16xbf16>
    %c0_7 = arith.constant 0 : index
    %c0_8 = arith.constant 0 : index
    %5 = vector.load %arg2[%c0_7, %c0_8] : memref<16x128xbf16, #tpu.memory_space<vmem>>, vector<16x128xbf16>
    %cst = arith.constant dense<0.000000e+00> : vector<16x128xf32>
    %6 = tpu.matmul %4, %5, %cst {dimension_numbers = #tpu.dot_dimension_numbers<[1], [0], [0], [1], [0, 0, 1, 1], [], []>} : vector<16x16xbf16>, vector<16x128xbf16>, vector<16x128xf32> -> vector<16x128xf32>
    %7 = vector.broadcast %0 : vector<1x128xf32> to vector<16x128xf32>
    %8 = arith.addf %6, %7 : vector<16x128xf32>
    %cst_9 = arith.constant 0.000000e+00 : f32
    %9 = vector.broadcast %cst_9 : f32 to vector<16x128xf32>
    %10 = arith.maximumf %8, %9 : vector<16x128xf32>
    %11 = arith.truncf %10 : vector<16x128xf32> to vector<16x128xbf16>
    %c0_10 = arith.constant 0 : index
    %c0_11 = arith.constant 0 : index
    %12 = vector.load %arg4[%c0_10, %c0_11] : memref<128x128xbf16, #tpu.memory_space<vmem>>, vector<128x128xbf16>
    %cst_12 = arith.constant dense<0.000000e+00> : vector<16x128xf32>
    %13 = tpu.matmul %11, %12, %cst_12 {dimension_numbers = #tpu.dot_dimension_numbers<[1], [0], [0], [1], [0, 0, 1, 1], [], []>} : vector<16x128xbf16>, vector<128x128xbf16>, vector<16x128xf32> -> vector<16x128xf32>
    %14 = vector.broadcast %1 : vector<1x128xf32> to vector<16x128xf32>
    %15 = arith.addf %13, %14 : vector<16x128xf32>
    %cst_13 = arith.constant 0.000000e+00 : f32
    %16 = vector.broadcast %cst_13 : f32 to vector<16x128xf32>
    %17 = arith.maximumf %15, %16 : vector<16x128xf32>
    %18 = arith.truncf %17 : vector<16x128xf32> to vector<16x128xbf16>
    %c0_14 = arith.constant 0 : index
    %c0_15 = arith.constant 0 : index
    %19 = vector.load %arg6[%c0_14, %c0_15] : memref<128x128xbf16, #tpu.memory_space<vmem>>, vector<128x128xbf16>
    %cst_16 = arith.constant dense<0.000000e+00> : vector<16x128xf32>
    %20 = tpu.matmul %18, %19, %cst_16 {dimension_numbers = #tpu.dot_dimension_numbers<[1], [0], [0], [1], [0, 0, 1, 1], [], []>} : vector<16x128xbf16>, vector<128x128xbf16>, vector<16x128xf32> -> vector<16x128xf32>
    %21 = vector.broadcast %2 : vector<1x128xf32> to vector<16x128xf32>
    %22 = arith.addf %20, %21 : vector<16x128xf32>
    %cst_17 = arith.constant dense<0xFF800000> : vector<16xf32>
    %23 = vector.multi_reduction <maximumf>, %22, %cst_17 [1] : vector<16x128xf32> to vector<16xf32>
    %24 = vector.shape_cast %23 : vector<16xf32> to vector<16x1xf32>
    %25 = vector.broadcast %24 : vector<16x1xf32> to vector<16x128xf32>
    %26 = arith.subf %22, %25 : vector<16x128xf32>
    %27 = math.exp %26 : vector<16x128xf32>
    %cst_18 = arith.constant dense<0.000000e+00> : vector<16xf32>
    %28 = vector.multi_reduction <add>, %27, %cst_18 [1] : vector<16x128xf32> to vector<16xf32>
    %29 = vector.shape_cast %28 : vector<16xf32> to vector<16x1xf32>
    %30 = vector.broadcast %29 : vector<16x1xf32> to vector<16x128xf32>
    %31 = arith.divf %27, %30 : vector<16x128xf32>
    %c0_19 = arith.constant 0 : index
    %c0_20 = arith.constant 0 : index
    %32 = vector.load %arg8[%c0_19, %c0_20] : memref<16x128xf32, #tpu.memory_space<vmem>>, vector<16x128xf32>
    tpu.vector_store %arg8[%c0_19, %c0_20], %31 {strides = array<i32>} : memref<16x128xf32, #tpu.memory_space<vmem>>, vector<16x128xf32>,
    return
  }
  func.func @transform_0(%arg0: i32) -> (i32, i32) {
    %c0_i32 = arith.constant 0 : i32
    %c0_i32_0 = arith.constant 0 : i32
    return %arg0, %c0_i32 : i32, i32
  }
  func.func @transform_1(%arg0: i32) -> (i32, i32) {
    %c0_i32 = arith.constant 0 : i32
    %c0_i32_0 = arith.constant 0 : i32
    %c0_i32_1 = arith.constant 0 : i32
    return %c0_i32, %c0_i32_0 : i32, i32
  }
  func.func @transform_2(%arg0: i32) -> (i32, i32) {
    %c0_i32 = arith.constant 0 : i32
    %c0_i32_0 = arith.constant 0 : i32
    %c0_i32_1 = arith.constant 0 : i32
    return %c0_i32, %c0_i32_0 : i32, i32
  }
  func.func @transform_3(%arg0: i32) -> (i32, i32) {
    %c0_i32 = arith.constant 0 : i32
    %c0_i32_0 = arith.constant 0 : i32
    %c0_i32_1 = arith.constant 0 : i32
    return %c0_i32, %c0_i32_0 : i32, i32
  }
  func.func @transform_4(%arg0: i32) -> (i32, i32) {
    %c0_i32 = arith.constant 0 : i32
    %c0_i32_0 = arith.constant 0 : i32
    %c0_i32_1 = arith.constant 0 : i32
    return %c0_i32, %c0_i32_0 : i32, i32
  }
  func.func @transform_5(%arg0: i32) -> (i32, i32) {
    %c0_i32 = arith.constant 0 : i32
    %c0_i32_0 = arith.constant 0 : i32
    %c0_i32_1 = arith.constant 0 : i32
    return %c0_i32, %c0_i32_0 : i32, i32
  }
  func.func @transform_6(%arg0: i32) -> (i32, i32) {
    %c0_i32 = arith.constant 0 : i32
    %c0_i32_0 = arith.constant 0 : i32
    %c0_i32_1 = arith.constant 0 : i32
    return %c0_i32, %c0_i32_0 : i32, i32
  }
  func.func @transform_7(%arg0: i32) -> (i32, i32) {
    %c0_i32 = arith.constant 0 : i32
    %c0_i32_0 = arith.constant 0 : i32
    return %arg0, %c0_i32 : i32, i32
  }
}

</mosaic_0001>

<llo_original>
// kernel: tpu_custom_call.1
$region0: #{tpu_custom_call.1}
  #allocation0 [shape = 'u32[]', space=smem, size = 0x4, offset = 0x4, fixed_abs, tag = 'smem constant byte address 0x4 - core index']
  #allocation1 [shape = 'u32[72,128]{1,0:T(1,128)}', space=vmem, size = 0x9000, scoped, tag = 'internal scratch']
  %s0 = inlined_call_operand.vmem [shape: f32[32,16], index: 0, kind: input, shape index: {}]
  %s1 = inlined_call_operand.vmem [shape: bf16[16,128], index: 1, kind: input, shape index: {}]
  %s2 = inlined_call_operand.vmem [shape: f32[1,128], index: 2, kind: input, shape index: {}]
  %s3 = inlined_call_operand.hbm [shape: bf16[128,128], index: 3, kind: input, shape index: {}]
  %s4 = inlined_call_operand.vmem [shape: f32[1,128], index: 4, kind: input, shape index: {}]
  %s5 = inlined_call_operand.hbm [shape: bf16[128,128], index: 5, kind: input, shape index: {}]
  %s6 = inlined_call_operand.vmem [shape: f32[1,128], index: 6, kind: input, shape index: {}]
  %s7 = inlined_call_operand.hbm [shape: f32[32,128], index: 7, kind: output, shape index: {}]
  %s8 = sld [smem:[#allocation0]]
  $region69: #{tpu_custom_call.1} parent=0
    _
  %s10 = ssub.s32 1, %s8
  %s11 = scalar_select 0, %s10, %s8
  $region1: #{tpu_custom_call.1} parent=0
    #allocation2 [shape = 'u8[32768]{0}', space=vmem, size = 0x8000, scoped, tag = 'input window, operand 3, single buffered']
    #allocation3 [shape = 's32[2]{0}', space=sflag, size = 0x8, scoped, tag = 'scoped memory for tpu_custom_call.1']
    #allocation4 [shape = 's32[2]{0}', space=sflag, size = 0x8, scoped, tag = 'scoped memory for tpu_custom_call.1']
    #allocation5 [shape = 'u8[32768]{0}', space=vmem, size = 0x8000, scoped, tag = 'input window, operand 5, single buffered']
    #allocation6 [shape = 's32[1]{0}', space=sflag, size = 0x4, scoped, tag = 'scoped memory for tpu_custom_call.1']
    #allocation7 [shape = 'u8[16384]{0}', space=vmem, size = 0x4000, scoped, tag = 'output window, operand 0']
    %12 = vsyncpa [#allocation3], 0
    %13 = vsyncpa [#allocation6], 0
    %14 = vsyncpa [#allocation4], 0
    %s15 = scalar_lea.sflag [#allocation4], 1
    %16 = vsyncpa %s15, 0
    loop: start=0, step=1, limit=4
    $region2: #{tpu_custom_call.1} parent=1 // loop_pre_header
      _
    $region3: #{tpu_custom_call.1} parent=1 // loop_header
      %s18 = sphi 0, %s22
      %p19 = scmp.ge.s32.totalorder %s18, 4
      %s28 = sphi 0, %s30
      %s31 = sphi 0, %s28
      %s32 = sphi 0, %s31
      %s48 = sphi 0, %s32
      %s52 = sphi 0, %s52
      %s54 = sphi 0, %s52
      %s55 = sphi 0, %s54
      %s69 = sphi 0, %s55
      %s73 = sphi 0, %s73
      %s75 = sphi 0, %s73
      %s76 = sphi 0, %s75
      %s90 = sphi 0, %s76
      %s94 = sphi 0, %s94
      %s96 = sphi 0, %s94
      %s97 = sphi 0, %s96
      %s111 = sphi 0, %s97
      %s115 = sphi 0, %s115
      %s117 = sphi 0, %s115
      %s118 = sphi 0, %s117
      %s132 = sphi 0, %s118
      %s136 = sphi 0, %s136
      %s138 = sphi 0, %s136
      %s139 = sphi 0, %s138
      %s153 = sphi 0, %s139
      %s157 = sphi 0, %s157
      %s159 = sphi 0, %s157
      %s160 = sphi 0, %s159
      %s174 = sphi 0, %s160
      %s180 = sphi 0, %s182
      %s183 = sphi 0, %s180
      %s184 = sphi 0, %s183
      %s200 = sphi 0, %s184
    $region4: #{tpu_custom_call.1} parent=1 // loop_header_branch
      %21 = sbr.rel (%p19) target = $region8
    $region5: #{tpu_custom_call.1} parent=1 // loop_body
      %s23 = ssub.s32 %s18, 1
      %s24 = ssub.s32 %s18, 2
      %s25 = sadd.s32 %s18, 1
      %s26 = ssub.s32 %s18, %s25
      %p27 = scmp.eq.s32.totalorder %s26, 0
      %s29 = sadd.s32 %s28, 1
      %s30 = scalar_select %p27, %s28, %s29
      %p33 = pneg %p27
      %p34 = scmp.eq.s32.totalorder %s18, 1
      %p35 = por %p33, %p34
      %p36 = scmp.ne.s32.totalorder %s28, %s31
      %p37 = scmp.eq.s32.totalorder %s18, 0
      %p38 = por %p36, %p37
      %p39 = scmp.ne.s32.totalorder %s28, %s31
      %p40 = scmp.eq.s32.totalorder %s23, 1
      %p41 = por %p39, %p40
      %p42 = scmp.ne.s32.totalorder %s31, %s32
      %p43 = scmp.eq.s32.totalorder %s23, 0
      %p44 = por %p42, %p43
      %p45 = scmp.ne.s32.totalorder %s31, %s32
      %p46 = scmp.eq.s32.totalorder %s24, 1
      %p47 = por %p45, %p46
      %p49 = scmp.ne.s32.totalorder %s32, %s48
      %p50 = scmp.eq.s32.totalorder %s24, 0
      %p51 = por %p49, %p50
      %s53 = sadd.s32 %s52, 1
      %p56 = scmp.eq.s32.totalorder %s18, 1
      %p57 = scmp.ne.s32.totalorder %s52, %s54
      %p58 = scmp.eq.s32.totalorder %s18, 0
      %p59 = por %p57, %p58
      %p60 = scmp.ne.s32.totalorder %s52, %s54
      %p61 = scmp.eq.s32.totalorder %s23, 1
      %p62 = por %p60, %p61
      %p63 = scmp.ne.s32.totalorder %s54, %s55
      %p64 = scmp.eq.s32.totalorder %s23, 0
      %p65 = por %p63, %p64
      %p66 = scmp.ne.s32.totalorder %s54, %s55
      %p67 = scmp.eq.s32.totalorder %s24, 1
      %p68 = por %p66, %p67
      %p70 = scmp.ne.s32.totalorder %s55, %s69
      %p71 = scmp.eq.s32.totalorder %s24, 0
      %p72 = por %p70, %p71
      %s74 = sadd.s32 %s73, 1
      %p77 = scmp.eq.s32.totalorder %s18, 1
      %p78 = scmp.ne.s32.totalorder %s73, %s75
      %p79 = scmp.eq.s32.totalorder %s18, 0
      %p80 = por %p78, %p79
      %p81 = scmp.ne.s32.totalorder %s73, %s75
      %p82 = scmp.eq.s32.totalorder %s23, 1
      %p83 = por %p81, %p82
      %p84 = scmp.ne.s32.totalorder %s75, %s76
      %p85 = scmp.eq.s32.totalorder %s23, 0
      %p86 = por %p84, %p85
      %p87 = scmp.ne.s32.totalorder %s75, %s76
      %p88 = scmp.eq.s32.totalorder %s24, 1
      %p89 = por %p87, %p88
      %p91 = scmp.ne.s32.totalorder %s76, %s90
      %p92 = scmp.eq.s32.totalorder %s24, 0
      %p93 = por %p91, %p92
      %s95 = sadd.s32 %s94, 1
      %p98 = scmp.eq.s32.totalorder %s18, 1
      %p99 = scmp.ne.s32.totalorder %s94, %s96
      %p100 = scmp.eq.s32.totalorder %s18, 0
      %p101 = por %p99, %p100
      %p102 = scmp.ne.s32.totalorder %s94, %s96
      %p103 = scmp.eq.s32.totalorder %s23, 1
      %p104 = por %p102, %p103
      %p105 = scmp.ne.s32.totalorder %s96, %s97
      %p106 = scmp.eq.s32.totalorder %s23, 0
      %p107 = por %p105, %p106
      %p108 = scmp.ne.s32.totalorder %s96, %s97
      %p109 = scmp.eq.s32.totalorder %s24, 1
      %p110 = por %p108, %p109
      %p112 = scmp.ne.s32.totalorder %s97, %s111
      %p113 = scmp.eq.s32.totalorder %s24, 0
      %p114 = por %p112, %p113
      %s116 = sadd.s32 %s115, 1
      %p119 = scmp.eq.s32.totalorder %s18, 1
      %p120 = scmp.ne.s32.totalorder %s115, %s117
      %p121 = scmp.eq.s32.totalorder %s18, 0
      %p122 = por %p120, %p121
      %p123 = scmp.ne.s32.totalorder %s115, %s117
      %p124 = scmp.eq.s32.totalorder %s23, 1
      %p125 = por %p123, %p124
      %p126 = scmp.ne.s32.totalorder %s117, %s118
      %p127 = scmp.eq.s32.totalorder %s23, 0
      %p128 = por %p126, %p127
      %p129 = scmp.ne.s32.totalorder %s117, %s118
      %p130 = scmp.eq.s32.totalorder %s24, 1
      %p131 = por %p129, %p130
      %p133 = scmp.ne.s32.totalorder %s118, %s132
      %p134 = scmp.eq.s32.totalorder %s24, 0
      %p135 = por %p133, %p134
      %s137 = sadd.s32 %s136, 1
      %p140 = scmp.eq.s32.totalorder %s18, 1
      %p141 = scmp.ne.s32.totalorder %s136, %s138
      %p142 = scmp.eq.s32.totalorder %s18, 0
      %p143 = por %p141, %p142
      %p144 = scmp.ne.s32.totalorder %s136, %s138
      %p145 = scmp.eq.s32.totalorder %s23, 1
      %p146 = por %p144, %p145
      %p147 = scmp.ne.s32.totalorder %s138, %s139
      %p148 = scmp.eq.s32.totalorder %s23, 0
      %p149 = por %p147, %p148
      %p150 = scmp.ne.s32.totalorder %s138, %s139
      %p151 = scmp.eq.s32.totalorder %s24, 1
      %p152 = por %p150, %p151
      %p154 = scmp.ne.s32.totalorder %s139, %s153
      %p155 = scmp.eq.s32.totalorder %s24, 0
      %p156 = por %p154, %p155
      %s158 = sadd.s32 %s157, 1
      %p161 = scmp.eq.s32.totalorder %s18, 1
      %p162 = scmp.ne.s32.totalorder %s157, %s159
      %p163 = scmp.eq.s32.totalorder %s18, 0
      %p164 = por %p162, %p163
      %p165 = scmp.ne.s32.totalorder %s157, %s159
      %p166 = scmp.eq.s32.totalorder %s23, 1
      %p167 = por %p165, %p166
      %p168 = scmp.ne.s32.totalorder %s159, %s160
      %p169 = scmp.eq.s32.totalorder %s23, 0
      %p170 = por %p168, %p169
      %p171 = scmp.ne.s32.totalorder %s159, %s160
      %p172 = scmp.eq.s32.totalorder %s24, 1
      %p173 = por %p171, %p172
      %p175 = scmp.ne.s32.totalorder %s160, %s174
      %p176 = scmp.eq.s32.totalorder %s24, 0
      %p177 = por %p175, %p176
      %s178 = ssub.s32 %s18, %s25
      %p179 = scmp.eq.s32.totalorder %s178, 0
      %s181 = sadd.s32 %s180, 1
      %s182 = scalar_select %p179, %s180, %s181
      %p185 = pneg %p179
      %p186 = scmp.eq.s32.totalorder %s18, 1
      %p187 = por %p185, %p186
      %p188 = scmp.ne.s32.totalorder %s180, %s183
      %p189 = scmp.eq.s32.totalorder %s18, 0
      %p190 = por %p188, %p189
      %p191 = scmp.ne.s32.totalorder %s180, %s183
      %p192 = scmp.eq.s32.totalorder %s23, 1
      %p193 = por %p191, %p192
      %p194 = scmp.ne.s32.totalorder %s183, %s184
      %p195 = scmp.eq.s32.totalorder %s23, 0
      %p196 = por %p194, %p195
      %p197 = scmp.ne.s32.totalorder %s183, %s184
      %p198 = scmp.eq.s32.totalorder %s24, 1
      %p199 = por %p197, %p198
      %p201 = scmp.ne.s32.totalorder %s184, %s200
      %p202 = scmp.eq.s32.totalorder %s24, 0
      %p203 = por %p201, %p202
      %p204 = scmp.le.s32.totalorder 1, %s18
      %p205 = scmp.lt.s32.totalorder %s18, 3
      %p206 = pnand %p204, %p205
      %p207 = pneg %p206
      // Predicated region
      $region9: #{tpu_custom_call.1} parent=5 // pred_check
        _
      $region10: #{tpu_custom_call.1} parent=5 // pred_check_branch
        %209 = sbr.rel (%p206) target = $region12
      $region11: #{tpu_custom_call.1} parent=5 // pred_region
        %s210 = ssub.s32 %s18, 1
        // Predicated region
        $region13: #{tpu_custom_call.1} parent=11 // pred_check
          %p211 = pneg %p65
        $region14: #{tpu_custom_call.1} parent=11 // pred_check_branch
          %213 = sbr.rel (%p211) target = $region16
        $region15: #{tpu_custom_call.1} parent=11 // pred_region
          _
        $region16: #{tpu_custom_call.1} parent=11 // pred_fallthru
          _
        // Predicated region
        $region17: #{tpu_custom_call.1} parent=11 // pred_check
          %p214 = pneg %p86
        $region18: #{tpu_custom_call.1} parent=11 // pred_check_branch
          %216 = sbr.rel (%p214) target = $region20
        $region19: #{tpu_custom_call.1} parent=11 // pred_region
          _
        $region20: #{tpu_custom_call.1} parent=11 // pred_fallthru
          _
        // Predicated region
        $region21: #{tpu_custom_call.1} parent=11 // pred_check
          %p217 = pneg %p107
        $region22: #{tpu_custom_call.1} parent=11 // pred_check_branch
          %219 = sbr.rel (%p217) target = $region24
        $region23: #{tpu_custom_call.1} parent=11 // pred_region
          %221 = vsyncadd [#allocation3], 0
          %s222 = sshll.u32 %s3, 4
          %s223 = int_to_ptr.hbm [resolvable:$true] %s222
          %s224 = sshll.u32 [#allocation2], 4
          %s225 = int_to_ptr.vmem [resolvable:$true] %s224
          %230 = dma.hbm_to_vmem [thread:$0]  %s223, 1024, %s225, [#allocation3], 64, 64, 4
        $region24: #{tpu_custom_call.1} parent=11 // pred_fallthru
          _
        // Predicated region
        $region25: #{tpu_custom_call.1} parent=11 // pred_check
          %p231 = pneg %p128
        $region26: #{tpu_custom_call.1} parent=11 // pred_check_branch
          %233 = sbr.rel (%p231) target = $region28
        $region27: #{tpu_custom_call.1} parent=11 // pred_region
          _
        $region28: #{tpu_custom_call.1} parent=11 // pred_fallthru
          _
        // Predicated region
        $region29: #{tpu_custom_call.1} parent=11 // pred_check
          %p234 = pneg %p149
        $region30: #{tpu_custom_call.1} parent=11 // pred_check_branch
          %236 = sbr.rel (%p234) target = $region32
        $region31: #{tpu_custom_call.1} parent=11 // pred_region
          %238 = vsyncadd [#allocation6], 0
          %s239 = sshll.u32 %s5, 4
          %s240 = int_to_ptr.hbm [resolvable:$true] %s239
          %s241 = sshll.u32 [#allocation5], 4
          %s242 = int_to_ptr.vmem [resolvable:$true] %s241
          %247 = dma.hbm_to_vmem [thread:$0]  %s240, 1024, %s242, [#allocation6], 64, 64, 4
        $region32: #{tpu_custom_call.1} parent=11 // pred_fallthru
          _
        // Predicated region
        $region33: #{tpu_custom_call.1} parent=11 // pred_check
          %p248 = pneg %p170
        $region34: #{tpu_custom_call.1} parent=11 // pred_check_branch
          %250 = sbr.rel (%p248) target = $region36
        $region35: #{tpu_custom_call.1} parent=11 // pred_region
          _
        $region36: #{tpu_custom_call.1} parent=11 // pred_fallthru
          _
      $region12: #{tpu_custom_call.1} parent=5 // pred_fallthru
        _
      %p251 = scmp.lt.s32.totalorder %s18, 2
      // Predicated region
      $region37: #{tpu_custom_call.1} parent=5 // pred_check
        %p252 = pneg %p251
      $region38: #{tpu_custom_call.1} parent=5 // pred_check_branch
        %254 = sbr.rel (%p252) target = $region40
      $region39: #{tpu_custom_call.1} parent=5 // pred_region
        // Predicated region
        $region41: #{tpu_custom_call.1} parent=39 // pred_check
          %p255 = pneg %p38
        $region42: #{tpu_custom_call.1} parent=39 // pred_check_branch
          %257 = sbr.rel (%p255) target = $region44
        $region43: #{tpu_custom_call.1} parent=39 // pred_region
          %s258 = smul.u32 2, %s18
          %p259 = scmp.lt.s32.totalorder %s258, 3
          %s260 = scalar_select %p259, %s258, 3
          %s261 = smul.addr %s260, 8
          %s262 = scalar_lea.vmem %s0, %s261
          %s263 = smul.u32 2, %s18
        $region44: #{tpu_custom_call.1} parent=39 // pred_fallthru
          _
      $region40: #{tpu_custom_call.1} parent=5 // pred_fallthru
        _
      %p264 = scmp.le.s32.totalorder 1, %s18
      %p265 = scmp.lt.s32.totalorder %s18, 3
      %p266 = pnand %p264, %p265
      %p267 = pneg %p266
      // Predicated region
      $region45: #{tpu_custom_call.1} parent=5 // pred_check
        _
      $region46: #{tpu_custom_call.1} parent=5 // pred_check_branch
        %269 = sbr.rel (%p266) target = $region48
      $region47: #{tpu_custom_call.1} parent=5 // pred_region
        %s270 = ssub.s32 %s18, 1
        // Predicated region
        $region49: #{tpu_custom_call.1} parent=47 // pred_check
          %p271 = pneg %p107
        $region50: #{tpu_custom_call.1} parent=47 // pred_check_branch
          %273 = sbr.rel (%p271) target = $region52
        $region51: #{tpu_custom_call.1} parent=47 // pred_region
          %275 = dma.done [#allocation3], 1024
        $region52: #{tpu_custom_call.1} parent=47 // pred_fallthru
          _
        // Predicated region
        $region53: #{tpu_custom_call.1} parent=47 // pred_check
          %p276 = pneg %p149
        $region54: #{tpu_custom_call.1} parent=47 // pred_check_branch
          %278 = sbr.rel (%p276) target = $region56
        $region55: #{tpu_custom_call.1} parent=47 // pred_region
          %280 = dma.done [#allocation6], 1024
        $region56: #{tpu_custom_call.1} parent=47 // pred_fallthru
          _
        %s281 = smul.u32 2, %s23
        %p282 = scmp.lt.s32.totalorder %s281, 3
        %s283 = scalar_select %p282, %s281, 3
        %s284 = smul.addr %s283, 8
        %s285 = scalar_lea.vmem %s0, %s284
        %p286 = pneg %p44
        %p287 = pneg %p41
        %p288 = pneg %p65
        %p289 = pneg %p62
        %p290 = pneg %p86
        %p291 = pneg %p83
        %p292 = pneg %p107
        %p293 = pneg %p104
        %p294 = pneg %p128
        %p295 = pneg %p125
        %p296 = pneg %p149
        %p297 = pneg %p146
        %p298 = pneg %p170
        %p299 = pneg %p167
        %p300 = pneg %p196
        %p301 = pneg %p193
        %s302 = sand.u32 %s183, 1
        %s303 = scalar_lea.sflag [#allocation4], %s302
        %s304 = sand.u32 %s183, 1
        %s305 = smul.addr %s304, 16
        %s306 = scalar_lea.vmem [#allocation7], %s305
        %s307 = smul.u32 2, %s23
        %p308 = scmp.lt.s32.totalorder %s307, 3
        %s309 = scalar_select %p308, %s307, 3
        %s310 = smul.addr %s309, 8
        %s311 = scalar_lea.vmem %s0, %s310
        %s312 = smul.u32 2, %s23
        %s313 = smul.u32 2, %s23
        %v315 = vld [vmem:[%s2] sm:$0x1]
        %v316 = vld [vmem:[%s4] sm:$0x1]
        %v317 = vld [vmem:[%s6] sm:$0x1]
        %v318 = vld [vmem:[%s311] sm:$0xff]
        %v319 = vld [vmem:[%s311 + $0x8] sm:$0xff]
        %v320 = vpack.c.bf16 %v319, %v318
        %v321 = vld [vmem:[%s1] sm:$0xf]
        %v322 = vld [vmem:[%s1 + $0x4] sm:$0xf]
        %v324 = vperm.slane %v315, 0
        %v328 = vunpack.c.l.b16 %v321
        %v329 = vunpack.c.l.b16 %v322
        %v330 = vpack.c.b16 %v329, %v328
        %vm332 = vcmask 130048
        %v334 = vsel %vm332, %v320, 0
        %336 = vmatpush.bf16.msra.mxu0 0
        %337 = vmatpush.bf16.msra.mxu0 0
        %338 = vmatpush.bf16.msra.mxu0 0
        %339 = vmatpush.bf16.msra.mxu0 0
        %340 = vmatpush.bf16.msra.mxu0 0
        %341 = vmatpush.bf16.msra.mxu0 0
        %342 = vmatpush.bf16.msra.mxu0 0
        %343 = vmatpush.bf16.msra.mxu0 %v330
        %344 = vmatmul.bf16.gmra.mxu0 %v334
        %v345 = vpop.f32.mrf.mxu0
        %v346 = vadd.f32 %v324, %v345
        %v347 = vpop.f32.mrf.mxu0
        %v348 = vadd.f32 %v324, %v347
        %349 = vdwg.mxu0
        %v350 = vmax.f32 %v346, 0.0
        %v351 = vmax.f32 %v348, 0.0
        %v352 = vpack.c.bf16 %v351, %v350
        %v353 = vld [vmem:[#allocation2] sm:$0xf]
        %v354 = vld [vmem:[#allocation2 + $0x4] sm:$0xf]
        %v355 = vld [vmem:[#allocation2 + $0x8] sm:$0xf]
        %v356 = vld [vmem:[#allocation2 + $0xc] sm:$0xf]
        %v357 = vld [vmem:[#allocation2 + $0x10] sm:$0xf]
        %v358 = vld [vmem:[#allocation2 + $0x14] sm:$0xf]
        %v359 = vld [vmem:[#allocation2 + $0x18] sm:$0xf]
        %v360 = vld [vmem:[#allocation2 + $0x1c] sm:$0xf]
        %v361 = vld [vmem:[#allocation2 + $0x20] sm:$0xf]
        %v362 = vld [vmem:[#allocation2 + $0x24] sm:$0xf]
        %v363 = vld [vmem:[#allocation2 + $0x28] sm:$0xf]
        %v364 = vld [vmem:[#allocation2 + $0x2c] sm:$0xf]
        %v365 = vld [vmem:[#allocation2 + $0x30] sm:$0xf]
        %v366 = vld [vmem:[#allocation2 + $0x34] sm:$0xf]
        %v367 = vld [vmem:[#allocation2 + $0x38] sm:$0xf]
        %v368 = vld [vmem:[#allocation2 + $0x3c] sm:$0xf]
        %v370 = vperm.slane %v316, 0
        %v388 = vunpack.c.l.b16 %v353
        %v389 = vunpack.c.l.b16 %v354
        %v390 = vunpack.c.l.b16 %v355
        %v391 = vunpack.c.l.b16 %v356
        %v392 = vunpack.c.l.b16 %v357
        %v393 = vunpack.c.l.b16 %v358
        %v394 = vunpack.c.l.b16 %v359
        %v395 = vunpack.c.l.b16 %v360
        %v396 = vunpack.c.l.b16 %v361
        %v397 = vunpack.c.l.b16 %v362
        %v398 = vunpack.c.l.b16 %v363
        %v399 = vunpack.c.l.b16 %v364
        %v400 = vunpack.c.l.b16 %v365
        %v401 = vunpack.c.l.b16 %v366
        %v402 = vunpack.c.l.b16 %v367
        %v403 = vunpack.c.l.b16 %v368
        %v404 = vpack.c.b16 %v389, %v388
        %v405 = vpack.c.b16 %v391, %v390
        %v406 = vpack.c.b16 %v393, %v392
        %v407 = vpack.c.b16 %v395, %v394
        %v408 = vpack.c.b16 %v397, %v396
        %v409 = vpack.c.b16 %v399, %v398
        %v410 = vpack.c.b16 %v401, %v400
        %v411 = vpack.c.b16 %v403, %v402
        %420 = vmatpush.bf16.msra.mxu0 %v411
        %421 = vmatpush.bf16.msra.mxu0 %v410
        %422 = vmatpush.bf16.msra.mxu0 %v409
        %423 = vmatpush.bf16.msra.mxu0 %v408
        %424 = vmatpush.bf16.msra.mxu0 %v407
        %425 = vmatpush.bf16.msra.mxu0 %v406
        %426 = vmatpush.bf16.msra.mxu0 %v405
        %427 = vmatpush.bf16.msra.mxu0 %v404
        %428 = vmatmul.bf16.gmra.mxu0 %v352
        %v429 = vpop.f32.mrf.mxu0
        %v430 = vadd.f32 %v370, %v429
        %v431 = vpop.f32.mrf.mxu0
        %v432 = vadd.f32 %v370, %v431
        %433 = vdwg.mxu0
        %v434 = vmax.f32 %v430, 0.0
        %v435 = vmax.f32 %v432, 0.0
        %v436 = vpack.c.bf16 %v435, %v434
        %v437 = vld [vmem:[#allocation5] sm:$0xf]
        %v438 = vld [vmem:[#allocation5 + $0x4] sm:$0xf]
        %v439 = vld [vmem:[#allocation5 + $0x8] sm:$0xf]
        %v440 = vld [vmem:[#allocation5 + $0xc] sm:$0xf]
        %v441 = vld [vmem:[#allocation5 + $0x10] sm:$0xf]
        %v442 = vld [vmem:[#allocation5 + $0x14] sm:$0xf]
        %v443 = vld [vmem:[#allocation5 + $0x18] sm:$0xf]
        %v444 = vld [vmem:[#allocation5 + $0x1c] sm:$0xf]
        %v445 = vld [vmem:[#allocation5 + $0x20] sm:$0xf]
        %v446 = vld [vmem:[#allocation5 + $0x24] sm:$0xf]
        %v447 = vld [vmem:[#allocation5 + $0x28] sm:$0xf]
        %v448 = vld [vmem:[#allocation5 + $0x2c] sm:$0xf]
        %v449 = vld [vmem:[#allocation5 + $0x30] sm:$0xf]
        %v450 = vld [vmem:[#allocation5 + $0x34] sm:$0xf]
        %v451 = vld [vmem:[#allocation5 + $0x38] sm:$0xf]
        %v452 = vld [vmem:[#allocation5 + $0x3c] sm:$0xf]
        %v454 = vperm.slane %v317, 0
        %v472 = vunpack.c.l.b16 %v437
        %v473 = vunpack.c.l.b16 %v438
        %v474 = vunpack.c.l.b16 %v439
        %v475 = vunpack.c.l.b16 %v440
        %v476 = vunpack.c.l.b16 %v441
        %v477 = vunpack.c.l.b16 %v442
        %v478 = vunpack.c.l.b16 %v443
        %v479 = vunpack.c.l.b16 %v444
        %v480 = vunpack.c.l.b16 %v445
        %v481 = vunpack.c.l.b16 %v446
        %v482 = vunpack.c.l.b16 %v447
        %v483 = vunpack.c.l.b16 %v448
        %v484 = vunpack.c.l.b16 %v449
        %v485 = vunpack.c.l.b16 %v450
        %v486 = vunpack.c.l.b16 %v451
        %v487 = vunpack.c.l.b16 %v452
        %v488 = vpack.c.b16 %v473, %v472
        %v489 = vpack.c.b16 %v475, %v474
        %v490 = vpack.c.b16 %v477, %v476
        %v491 = vpack.c.b16 %v479, %v478
        %v492 = vpack.c.b16 %v481, %v480
        %v493 = vpack.c.b16 %v483, %v482
        %v494 = vpack.c.b16 %v485, %v484
        %v495 = vpack.c.b16 %v487, %v486
        %504 = vmatpush.bf16.msra.mxu0 %v495
        %505 = vmatpush.bf16.msra.mxu0 %v494
        %506 = vmatpush.bf16.msra.mxu0 %v493
        %507 = vmatpush.bf16.msra.mxu0 %v492
        %508 = vmatpush.bf16.msra.mxu0 %v491
        %509 = vmatpush.bf16.msra.mxu0 %v490
        %510 = vmatpush.bf16.msra.mxu0 %v489
        %511 = vmatpush.bf16.msra.mxu0 %v488
        %512 = vmatmul.bf16.gmra.mxu0 %v436
        %v513 = vpop.f32.mrf.mxu0
        %v514 = vadd.f32 %v454, %v513
        %v515 = vpop.f32.mrf.mxu0
        %v516 = vadd.f32 %v454, %v515
        %517 = vdwg.mxu0
        %518 = vmax.xlane.f32.xlu0 %v514
        %v519 = vpop.xlane.xlu0 %518
        %520 = vmax.xlane.f32.xlu0 %v516
        %v521 = vpop.xlane.xlu0 %520
        %v522 = vsub.f32 %v514, %v519
        %v523 = vsub.f32 %v516, %v521
        %v524 = vmul.f32 %v522, 1.442695
        %v525 = vpow.pop %v524
        %v526 = vmul.f32 %v523, 1.442695
        %v527 = vpow.pop %v526
        %528 = vadd.xlane.f32.xlu0 %v525
        %v529 = vpop.xlane.xlu0 %528
        %530 = vadd.xlane.f32.xlu0 %v527
        %v531 = vpop.xlane.xlu0 %530
        %v532 = vrcp.pop %v529
        %v533 = vmul.f32 %v529, %v532
        %v534 = vsub.f32 1.0, %v533
        %v535 = vmul.f32 %v532, %v534
        %v536 = vadd.f32 %v532, %v535
        %vm537 = vweird.f32 %v529
        %vm538 = vweird.f32 %v532
        %vm539 = vmor %vm537, %vm538
        %v540 = vsel %vm539, %v532, %v536
        %v541 = vand.u32 2147483647, %v529
        %vm542 = vcmp.eq.f32.partialorder %v541, 8.507059e+37
        %v543 = vand.u32 %v529, 2147483648
        %v544 = vor.u32 1.1754944e-38, %v543
        %v545 = vsel %vm542, %v544, %v540
        %v546 = vmul.f32 %v525, %v545
        %v547 = vrcp.pop %v531
        %v548 = vmul.f32 %v531, %v547
        %v549 = vsub.f32 1.0, %v548
        %v550 = vmul.f32 %v547, %v549
        %v551 = vadd.f32 %v547, %v550
        %vm552 = vweird.f32 %v531
        %vm553 = vweird.f32 %v547
        %vm554 = vmor %vm552, %vm553
        %v555 = vsel %vm554, %v547, %v551
        %v556 = vand.u32 2147483647, %v531
        %vm557 = vcmp.eq.f32.partialorder %v556, 8.507059e+37
        %v558 = vand.u32 %v531, 2147483648
        %v559 = vor.u32 1.1754944e-38, %v558
        %v560 = vsel %vm557, %v559, %v555
        %v561 = vmul.f32 %v527, %v560
        %562 = vst [vmem:[%s306] sm:$0xff] %v546
        %563 = vst [vmem:[%s306 + $0x8] sm:$0xff] %v561
        %s564 = sand.u32 %s183, 1
        %s565 = scalar_lea.sflag [#allocation4], %s564
        %s566 = sand.u32 %s183, 1
        %s567 = smul.addr %s566, 16
        %s568 = scalar_lea.vmem [#allocation7], %s567
        // Predicated region
        $region57: #{tpu_custom_call.1} parent=47 // pred_check
          %p569 = pneg %p193
        $region58: #{tpu_custom_call.1} parent=47 // pred_check_branch
          %571 = sbr.rel (%p569) target = $region60
        $region59: #{tpu_custom_call.1} parent=47 // pred_region
          %s572 = smul.u32 2, %s23
          %574 = vsyncadd %s565, 0
          %s575 = smul.addr %s572, 8
          %s576 = scalar_lea.hbm %s7, %s575
          %s577 = sshll.u32 %s568, 4
          %s578 = int_to_ptr.vmem [resolvable:$true] %s577
          %s579 = sshll.u32 %s576, 4
          %s580 = int_to_ptr.hbm [resolvable:$true] %s579
          %585 = dma.vmem_to_hbm [thread:$0]  %s578, 256, %s580, %s565, 128, 128, 8
        $region60: #{tpu_custom_call.1} parent=47 // pred_fallthru
          _
      $region48: #{tpu_custom_call.1} parent=5 // pred_fallthru
        _
      %p586 = scmp.le.s32.totalorder 2, %s18
      // Predicated region
      $region61: #{tpu_custom_call.1} parent=5 // pred_check
        %p587 = pneg %p586
      $region62: #{tpu_custom_call.1} parent=5 // pred_check_branch
        %589 = sbr.rel (%p587) target = $region64
      $region63: #{tpu_custom_call.1} parent=5 // pred_region
        %s590 = ssub.s32 %s18, 2
        // Predicated region
        $region65: #{tpu_custom_call.1} parent=63 // pred_check
          %p591 = pneg %p199
        $region66: #{tpu_custom_call.1} parent=63 // pred_check_branch
          %593 = sbr.rel (%p591) target = $region68
        $region67: #{tpu_custom_call.1} parent=63 // pred_region
          %s594 = sand.u32 %s184, 1
          %s595 = scalar_lea.sflag [#allocation4], %s594
          %s596 = sand.u32 %s184, 1
          %s597 = smul.addr %s596, 16
          %s598 = scalar_lea.vmem [#allocation7], %s597
          %600 = dma.done %s595, 256
        $region68: #{tpu_custom_call.1} parent=63 // pred_fallthru
          _
      $region64: #{tpu_custom_call.1} parent=5 // pred_fallthru
        _
    $region6: #{tpu_custom_call.1} parent=1 // loop_footer
      %s22 = sadd.s32 1, %s18
    $region7: #{tpu_custom_call.1} parent=1 // loop_footer_branch
      %17 = sbr.rel target = $region3
    $region8: #{tpu_custom_call.1} parent=1 // loop_exit
      _
    %601 = vsyncpa [#allocation3], 1
    %s602 = scalar_lea.sflag [#allocation3], 1
    %603 = vsyncpa %s602, 1
    %604 = vsyncpa [#allocation6], 1
    %605 = vsyncpa [#allocation4], 1
    %s606 = scalar_lea.sflag [#allocation4], 1
    %607 = vsyncpa %s606, 1

</llo_original>
